<compile_context>
chip_gen: v7x
topology: tpu7x:2x2x1
jax: 0.10.0
libtpu: 0.0.40
codegen_flags: <defaults>
</compile_context>

<pallas_src>
import functools

import jax
import jax.numpy as jnp
from jax import lax
from jax.experimental import pallas as pl
from jax.experimental.pallas import tpu as pltpu

LANES = 128
SUBLANES = 8
# ~2 MiB per input per pipeline buffer; 2 inputs x 2 buffers => ~8 MiB VMEM.
TARGET_BLOCK_BYTES = 2 * 1024 * 1024


def _round_up(v, m):
    return ((v + m - 1) // m) * m


def _focal_modulator(one_minus_pt, gamma):
    """(1 - pt) ** gamma, avoiding EUP pow for small integer gamma."""
    g = float(gamma)
    if g == 0.0:
        return jnp.ones_like(one_minus_pt)
    if g.is_integer() and 0 < g <= 8:
        out = one_minus_pt
        for _ in range(int(g) - 1):  # static unroll: pure VPU multiplies
            out = out * one_minus_pt
        return out
    return one_minus_pt ** g  # non-integer gamma fallback (EUP log+exp)


def _focal_terms(x, t, gamma):
    """Per-element (1-pt)**gamma * bce in f32 (alpha applied by the caller)."""
    x = x.astype(jnp.float32)
    t = t.astype(jnp.float32)
    # Numerically stable BCE-with-logits (== F.binary_cross_entropy_with_logits):
    #   bce = max(x, 0) - x * t + log1p(exp(-|x|))
    bce = jnp.maximum(x, 0.0) - x * t + jnp.log1p(jnp.exp(-jnp.abs(x)))
    pt = jnp.exp(-bce)
    return _focal_modulator(1.0 - pt, gamma) * bce


def _focal_bce_kernel(x_ref, t_ref, out_ref, *, gamma, rows_total, block_rows,
                      out_sublanes, needs_mask):
    focal = _focal_terms(x_ref[...], t_ref[...], gamma)

    def write_partial(vals):
        if out_sublanes == SUBLANES:
            # (block_rows, 128) -> (block_rows//8, 8, 128) is a tile-aligned
            # split of the sublane axis; sum over the leading axis is pure
            # cross-vreg VALU adds and the store is a full-vreg unmasked vst.
            part = vals.reshape(block_rows // SUBLANES, SUBLANES, LANES).sum(axis=0)
        else:
            # Tiny single-block case (rows < 8): plain per-lane sum.
            part = vals.sum(axis=0, keepdims=True)
        out_ref[...] = part.reshape(1, out_sublanes, LANES)

    if not needs_mask:
        # rows divide evenly into blocks: no mask work on any step.
        write_partial(focal)
    else:
        i = pl.program_id(0)
        is_last = i == pl.num_programs(0) - 1

        @pl.when(jnp.logical_not(is_last))
        def _():
            write_partial(focal)

        @pl.when(is_last)
        def _():
            # Only the last block can contain out-of-bounds (garbage) rows.
            # Row-index compare (not element index): no int32 overflow risk.
            grow = lax.broadcasted_iota(jnp.int32, focal.shape, 0) + i * block_rows
            write_partial(jnp.where(grow < rows_total, focal, 0.0))


def _choose_block_rows(rows, itemsize):
    """Dtype-aware block rows: byte budget + >=2 parallel blocks for v7x."""
    budget_rows = max(SUBLANES, TARGET_BLOCK_BYTES // (LANES * itemsize))
    if rows < 2 * SUBLANES:
        return rows  # single block equal to full row extent (always legal)
    # Guarantee >= 2 grid blocks so the "parallel" axis feeds both v7x TCs.
    half = _round_up(pl.cdiv(rows, 2), SUBLANES)
    return min(_round_up(budget_rows, SUBLANES), half)


def focal_bce_loss(inputs, targets, gamma=2.0, alpha=0.25):
    """Pallas implementation of FocalBCELoss.forward (returns a scalar)."""
    assert inputs.shape == targets.shape
    n_valid = int(inputs.size)
    if n_valid == 0:
        # mean() of an empty tensor is undefined; mirror with NaN.
        return jnp.float32(jnp.nan)

    # Flatten; keep the original dtype -- the kernel upcasts on-chip, so bf16
    # inputs move half the HBM bytes.
    x = inputs.reshape(-1)
    t = targets.reshape(-1)

    aligned = (n_valid // LANES) * LANES
    rem = n_valid - aligned

    # Ragged <128-element tail: tiny pure-JAX epilogue instead of a full-copy
    # jnp.pad pass over both tensors.
    tail_sum = jnp.float32(0.0)
    if rem:
        tail_sum = jnp.sum(_focal_terms(x[aligned:], t[aligned:], gamma))

    if aligned == 0:
        # Fewer than 128 elements total: no kernel launch needed.
        return jnp.float32(alpha) * tail_sum / jnp.float32(n_valid)

    rows = aligned // LANES
    x2 = x[:aligned].reshape(rows, LANES)
    t2 = t[:aligned].reshape(rows, LANES)

    itemsize = max(jnp.dtype(inputs.dtype).itemsize, jnp.dtype(targets.dtype).itemsize)
    block_rows = _choose_block_rows(rows, itemsize)
    n_blocks = pl.cdiv(rows, block_rows)
    needs_mask = (n_blocks * block_rows) != rows
    out_sublanes = SUBLANES if block_rows % SUBLANES == 0 else 1

    kernel = functools.partial(
        _focal_bce_kernel,
        gamma=float(gamma),
        rows_total=rows,
        block_rows=block_rows,
        out_sublanes=out_sublanes,
        needs_mask=needs_mask,
    )

    partials = pl.pallas_call(
        kernel,
        out_shape=jax.ShapeDtypeStruct((n_blocks, out_sublanes, LANES), jnp.float32),
        grid_spec=pltpu.PrefetchScalarGridSpec(
            num_scalar_prefetch=0,
            grid=(n_blocks,),
            in_specs=[
                pl.BlockSpec((block_rows, LANES), lambda i: (i, 0)),
                pl.BlockSpec((block_rows, LANES), lambda i: (i, 0)),
            ],
            out_specs=pl.BlockSpec((1, out_sublanes, LANES), lambda i: (i, 0, 0)),
        ),
        compiler_params=pltpu.CompilerParams(
            # Each step writes its own output block -> fully parallel grid
            # (shards across both TensorCores on v7x).
            dimension_semantics=("parallel",),
            # ~8 MiB double-buffered inputs + partials: give explicit headroom
            # without exceeding any generation's physical VMEM.
            vmem_limit_bytes=32 << 20,
        ),
    )(x2, t2)

    # Tiny cross-block / cross-lane reduction, alpha scale and mean outside.
    total = jnp.sum(partials) + tail_sum
    return jnp.float32(alpha) * total / jnp.float32(n_valid)


def _reference_focal_bce(inputs, targets, gamma=2.0, alpha=0.25):
    return jnp.mean(alpha * _focal_terms(inputs, targets, gamma))


def _check(shape, key, dtype=jnp.float32, gamma=2.0, alpha=0.25):
    k1, k2 = jax.random.split(key)
    logits = jax.random.normal(k1, shape, dtype=jnp.float32).astype(dtype)
    targets = (jax.random.uniform(k2, shape) > 0.5).astype(jnp.float32)
    loss = jax.block_until_ready(focal_bce_loss(logits, targets, gamma, alpha))
    ref = _reference_focal_bce(logits, targets, gamma, alpha)
    assert jnp.allclose(loss, ref, rtol=1e-5, atol=1e-5), (shape, dtype, loss, ref)


if __name__ == "__main__":
    key = jax.random.PRNGKey(0)
    keys = jax.random.split(key, 4)

    # NCHW-shaped logits/targets: lane-aligned fast path, single 16-row block.
    _check((2, 4, 16, 16), keys[0])
    # Multi-block parallel path (rows=96 -> 2 blocks of 48, no mask).
    _check((4, 3, 32, 32), keys[1])
    # Ragged: row-masked last block AND the <128-element pure-JAX tail.
    _check((2, 3, 20, 20), keys[2])
    # Tiny ragged shape: single sub-8-row block + tail epilogue, bf16 logits.
    _check((3, 5, 7, 9), keys[3], dtype=jnp.bfloat16)

    print("KERNEL_OK")
</pallas_src>

<mosaic_0001>
module attributes {stable_mosaic.version = 11 : i64} {
  func.func @_focal_bce_kernel(%arg0: i32, %arg1: memref<8x128xf32, #tpu.memory_space<vmem>>, %arg2: memref<8x128xf32, #tpu.memory_space<vmem>>, %arg3: memref<1x8x128xf32, #tpu.memory_space<vmem>>) attributes {dimension_semantics = [#tpu.dimension_semantics<parallel>], iteration_bounds = array<i64: 2>, scalar_prefetch = 0 : i64, scratch_operands = 0 : i64, tpu.core_type = #tpu.core_type<tc>, window_params = [{transform_indices = @transform_0, window_bounds = array<i64: 8, 128>}, {transform_indices = @transform_1, window_bounds = array<i64: 8, 128>}, {transform_indices = @transform_2, window_bounds = array<i64: 1, 8, 128>}]} {
    %c0 = arith.constant 0 : index
    %c0_0 = arith.constant 0 : index
    %0 = vector.load %arg1[%c0, %c0_0] : memref<8x128xf32, #tpu.memory_space<vmem>>, vector<8x128xf32>
    %c0_1 = arith.constant 0 : index
    %c0_2 = arith.constant 0 : index
    %1 = vector.load %arg2[%c0_1, %c0_2] : memref<8x128xf32, #tpu.memory_space<vmem>>, vector<8x128xf32>
    %cst = arith.constant 0.000000e+00 : f32
    %2 = vector.broadcast %cst : f32 to vector<8x128xf32>
    %3 = arith.maximumf %0, %2 : vector<8x128xf32>
    %4 = arith.mulf %0, %1 : vector<8x128xf32>
    %5 = arith.subf %3, %4 : vector<8x128xf32>
    %6 = math.absf %0 : vector<8x128xf32>
    %cst_3 = arith.constant 0.000000e+00 : f32
    %7 = vector.broadcast %cst_3 : f32 to vector<8x128xf32>
    %8 = arith.subf %7, %6 : vector<8x128xf32>
    %9 = math.exp %8 : vector<8x128xf32>
    %10 = math.log1p %9 : vector<8x128xf32>
    %11 = arith.addf %5, %10 : vector<8x128xf32>
    %cst_4 = arith.constant 0.000000e+00 : f32
    %12 = vector.broadcast %cst_4 : f32 to vector<8x128xf32>
    %13 = arith.subf %12, %11 : vector<8x128xf32>
    %14 = math.exp %13 : vector<8x128xf32>
    %cst_5 = arith.constant 1.000000e+00 : f32
    %15 = vector.broadcast %cst_5 : f32 to vector<8x128xf32>
    %16 = arith.subf %15, %14 : vector<8x128xf32>
    %17 = arith.mulf %16, %16 : vector<8x128xf32>
    %18 = arith.mulf %17, %11 : vector<8x128xf32>
    %19 = vector.shape_cast %18 : vector<8x128xf32> to vector<1x8x128xf32>
    %cst_6 = arith.constant dense<0.000000e+00> : vector<8x128xf32>
    %20 = vector.multi_reduction <add>, %19, %cst_6 [0] : vector<1x8x128xf32> to vector<8x128xf32>
    %21 = vector.shape_cast %20 : vector<8x128xf32> to vector<1x8x128xf32>
    %c0_7 = arith.constant 0 : index
    %c0_8 = arith.constant 0 : index
    %c0_9 = arith.constant 0 : index
    %22 = vector.load %arg3[%c0_7, %c0_8, %c0_9] : memref<1x8x128xf32, #tpu.memory_space<vmem>>, vector<1x8x128xf32>
    tpu.vector_store %arg3[%c0_7, %c0_8, %c0_9], %21 {strides = array<i32>} : memref<1x8x128xf32, #tpu.memory_space<vmem>>, vector<1x8x128xf32>,
    return
  }
  func.func @transform_0(%arg0: i32) -> (i32, i32) {
    %c0_i32 = arith.constant 0 : i32
    %c0_i32_0 = arith.constant 0 : i32
    return %arg0, %c0_i32 : i32, i32
  }
  func.func @transform_1(%arg0: i32) -> (i32, i32) {
    %c0_i32 = arith.constant 0 : i32
    %c0_i32_0 = arith.constant 0 : i32
    return %arg0, %c0_i32 : i32, i32
  }
  func.func @transform_2(%arg0: i32) -> (i32, i32, i32) {
    %c0_i32 = arith.constant 0 : i32
    %c0_i32_0 = arith.constant 0 : i32
    %c0_i32_1 = arith.constant 0 : i32
    return %arg0, %c0_i32, %c0_i32_0 : i32, i32, i32
  }
}

</mosaic_0001>

<llo_original>
// kernel: tpu_custom_call.1
$region0: #{tpu_custom_call.1}
  #allocation0 [shape = 'u32[]', space=smem, size = 0x4, offset = 0x4, fixed_abs, tag = 'smem constant byte address 0x4 - core index']
  #allocation1 [shape = 'u32[144,128]{1,0:T(1,128)}', space=vmem, size = 0x12000, scoped, tag = 'internal scratch']
  %s0 = inlined_call_operand.hbm [shape: f32[16,128], index: 0, kind: input, shape index: {}]
  %s1 = inlined_call_operand.hbm [shape: f32[16,128], index: 1, kind: input, shape index: {}]
  %s2 = inlined_call_operand.hbm [shape: f32[2,8,128], index: 2, kind: output, shape index: {}]
  %s3 = sld [smem:[#allocation0]]
  $region49: #{tpu_custom_call.1} parent=0
    _
  %s5 = ssub.s32 1, %s3
  %s6 = scalar_select 0, %s5, %s3
  $region1: #{tpu_custom_call.1} parent=0
    #allocation2 [shape = 'u8[8192]{0}', space=vmem, size = 0x2000, scoped, tag = 'input window, operand 0']
    #allocation3 [shape = 's32[2]{0}', space=sflag, size = 0x8, scoped, tag = 'scoped memory for tpu_custom_call.1']
    #allocation4 [shape = 's32[2]{0}', space=sflag, size = 0x8, scoped, tag = 'scoped memory for tpu_custom_call.1']
    #allocation5 [shape = 'u8[8192]{0}', space=vmem, size = 0x2000, scoped, tag = 'input window, operand 1']
    #allocation6 [shape = 's32[2]{0}', space=sflag, size = 0x8, scoped, tag = 'scoped memory for tpu_custom_call.1']
    #allocation7 [shape = 'u8[8192]{0}', space=vmem, size = 0x2000, scoped, tag = 'output window, operand 0']
    %7 = vsyncpa [#allocation3], 0
    %s8 = scalar_lea.sflag [#allocation3], 1
    %9 = vsyncpa %s8, 0
    %10 = vsyncpa [#allocation6], 0
    %s11 = scalar_lea.sflag [#allocation6], 1
    %12 = vsyncpa %s11, 0
    %13 = vsyncpa [#allocation4], 0
    %s14 = scalar_lea.sflag [#allocation4], 1
    %15 = vsyncpa %s14, 0
    loop: start=0, step=1, limit=4
    $region2: #{tpu_custom_call.1} parent=1 // loop_pre_header
      _
    $region3: #{tpu_custom_call.1} parent=1 // loop_header
      %s17 = sphi 0, %s21
      %p18 = scmp.ge.s32.totalorder %s17, 4
      %s27 = sphi 0, %s29
      %s30 = sphi 0, %s27
      %s31 = sphi 0, %s30
      %s47 = sphi 0, %s31
      %s53 = sphi 0, %s55
      %s56 = sphi 0, %s53
      %s57 = sphi 0, %s56
      %s73 = sphi 0, %s57
      %s79 = sphi 0, %s81
      %s82 = sphi 0, %s79
      %s83 = sphi 0, %s82
      %s99 = sphi 0, %s83
    $region4: #{tpu_custom_call.1} parent=1 // loop_header_branch
      %20 = sbr.rel (%p18) target = $region8
    $region5: #{tpu_custom_call.1} parent=1 // loop_body
      %s22 = ssub.s32 %s17, 1
      %s23 = ssub.s32 %s17, 2
      %s24 = sadd.s32 %s17, 1
      %s25 = ssub.s32 %s17, %s24
      %p26 = scmp.eq.s32.totalorder %s25, 0
      %s28 = sadd.s32 %s27, 1
      %s29 = scalar_select %p26, %s27, %s28
      %p32 = pneg %p26
      %p33 = scmp.eq.s32.totalorder %s17, 1
      %p34 = por %p32, %p33
      %p35 = scmp.ne.s32.totalorder %s27, %s30
      %p36 = scmp.eq.s32.totalorder %s17, 0
      %p37 = por %p35, %p36
      %p38 = scmp.ne.s32.totalorder %s27, %s30
      %p39 = scmp.eq.s32.totalorder %s22, 1
      %p40 = por %p38, %p39
      %p41 = scmp.ne.s32.totalorder %s30, %s31
      %p42 = scmp.eq.s32.totalorder %s22, 0
      %p43 = por %p41, %p42
      %p44 = scmp.ne.s32.totalorder %s30, %s31
      %p45 = scmp.eq.s32.totalorder %s23, 1
      %p46 = por %p44, %p45
      %p48 = scmp.ne.s32.totalorder %s31, %s47
      %p49 = scmp.eq.s32.totalorder %s23, 0
      %p50 = por %p48, %p49
      %s51 = ssub.s32 %s17, %s24
      %p52 = scmp.eq.s32.totalorder %s51, 0
      %s54 = sadd.s32 %s53, 1
      %s55 = scalar_select %p52, %s53, %s54
      %p58 = pneg %p52
      %p59 = scmp.eq.s32.totalorder %s17, 1
      %p60 = por %p58, %p59
      %p61 = scmp.ne.s32.totalorder %s53, %s56
      %p62 = scmp.eq.s32.totalorder %s17, 0
      %p63 = por %p61, %p62
      %p64 = scmp.ne.s32.totalorder %s53, %s56
      %p65 = scmp.eq.s32.totalorder %s22, 1
      %p66 = por %p64, %p65
      %p67 = scmp.ne.s32.totalorder %s56, %s57
      %p68 = scmp.eq.s32.totalorder %s22, 0
      %p69 = por %p67, %p68
      %p70 = scmp.ne.s32.totalorder %s56, %s57
      %p71 = scmp.eq.s32.totalorder %s23, 1
      %p72 = por %p70, %p71
      %p74 = scmp.ne.s32.totalorder %s57, %s73
      %p75 = scmp.eq.s32.totalorder %s23, 0
      %p76 = por %p74, %p75
      %s77 = ssub.s32 %s17, %s24
      %p78 = scmp.eq.s32.totalorder %s77, 0
      %s80 = sadd.s32 %s79, 1
      %s81 = scalar_select %p78, %s79, %s80
      %p84 = pneg %p78
      %p85 = scmp.eq.s32.totalorder %s17, 1
      %p86 = por %p84, %p85
      %p87 = scmp.ne.s32.totalorder %s79, %s82
      %p88 = scmp.eq.s32.totalorder %s17, 0
      %p89 = por %p87, %p88
      %p90 = scmp.ne.s32.totalorder %s79, %s82
      %p91 = scmp.eq.s32.totalorder %s22, 1
      %p92 = por %p90, %p91
      %p93 = scmp.ne.s32.totalorder %s82, %s83
      %p94 = scmp.eq.s32.totalorder %s22, 0
      %p95 = por %p93, %p94
      %p96 = scmp.ne.s32.totalorder %s82, %s83
      %p97 = scmp.eq.s32.totalorder %s23, 1
      %p98 = por %p96, %p97
      %p100 = scmp.ne.s32.totalorder %s83, %s99
      %p101 = scmp.eq.s32.totalorder %s23, 0
      %p102 = por %p100, %p101
      %p103 = scmp.le.s32.totalorder 1, %s17
      %p104 = scmp.lt.s32.totalorder %s17, 3
      %p105 = pnand %p103, %p104
      %p106 = pneg %p105
      // Predicated region
      $region9: #{tpu_custom_call.1} parent=5 // pred_check
        _
      $region10: #{tpu_custom_call.1} parent=5 // pred_check_branch
        %108 = sbr.rel (%p105) target = $region12
      $region11: #{tpu_custom_call.1} parent=5 // pred_region
        %s109 = ssub.s32 %s17, 1
      $region12: #{tpu_custom_call.1} parent=5 // pred_fallthru
        _
      %p110 = scmp.lt.s32.totalorder %s17, 2
      // Predicated region
      $region13: #{tpu_custom_call.1} parent=5 // pred_check
        %p111 = pneg %p110
      $region14: #{tpu_custom_call.1} parent=5 // pred_check_branch
        %113 = sbr.rel (%p111) target = $region16
      $region15: #{tpu_custom_call.1} parent=5 // pred_region
        // Predicated region
        $region17: #{tpu_custom_call.1} parent=15 // pred_check
          %p114 = pneg %p37
        $region18: #{tpu_custom_call.1} parent=15 // pred_check_branch
          %116 = sbr.rel (%p114) target = $region20
        $region19: #{tpu_custom_call.1} parent=15 // pred_region
          %s117 = sand.u32 %s27, 1
          %s118 = scalar_lea.sflag [#allocation3], %s117
          %s119 = sand.u32 %s27, 1
          %s120 = smul.addr %s119, 8
          %s121 = scalar_lea.vmem [#allocation2], %s120
          %s123 = ssub.s32 128, 128
          %124 = vsyncadd %s118, %s123
          %s125 = smul.addr %s17, 128
          %s126 = scalar_lea.hbm %s0, %s125
          %s128 = sshll.u32 %s121, 4
          %s129 = int_to_ptr.vmem [resolvable:$true] %s128
          %131 = dma.hbm_to_vmem [thread:$0]  %s126, 128, %s129, %s118
        $region20: #{tpu_custom_call.1} parent=15 // pred_fallthru
          _
        // Predicated region
        $region21: #{tpu_custom_call.1} parent=15 // pred_check
          %p132 = pneg %p63
        $region22: #{tpu_custom_call.1} parent=15 // pred_check_branch
          %134 = sbr.rel (%p132) target = $region24
        $region23: #{tpu_custom_call.1} parent=15 // pred_region
          %s135 = sand.u32 %s53, 1
          %s136 = scalar_lea.sflag [#allocation6], %s135
          %s137 = sand.u32 %s53, 1
          %s138 = smul.addr %s137, 8
          %s139 = scalar_lea.vmem [#allocation5], %s138
          %s141 = ssub.s32 128, 128
          %142 = vsyncadd %s136, %s141
          %s143 = smul.addr %s17, 128
          %s144 = scalar_lea.hbm %s1, %s143
          %s146 = sshll.u32 %s139, 4
          %s147 = int_to_ptr.vmem [resolvable:$true] %s146
          %149 = dma.hbm_to_vmem [thread:$0]  %s144, 128, %s147, %s136
        $region24: #{tpu_custom_call.1} parent=15 // pred_fallthru
          _
      $region16: #{tpu_custom_call.1} parent=5 // pred_fallthru
        _
      %p150 = scmp.le.s32.totalorder 1, %s17
      %p151 = scmp.lt.s32.totalorder %s17, 3
      %p152 = pnand %p150, %p151
      %p153 = pneg %p152
      // Predicated region
      $region25: #{tpu_custom_call.1} parent=5 // pred_check
        _
      $region26: #{tpu_custom_call.1} parent=5 // pred_check_branch
        %155 = sbr.rel (%p152) target = $region28
      $region27: #{tpu_custom_call.1} parent=5 // pred_region
        %s156 = ssub.s32 %s17, 1
        %s157 = sand.u32 %s30, 1
        %s158 = scalar_lea.sflag [#allocation3], %s157
        %s159 = sand.u32 %s30, 1
        %s160 = smul.addr %s159, 8
        %s161 = scalar_lea.vmem [#allocation2], %s160
        // Predicated region
        $region29: #{tpu_custom_call.1} parent=27 // pred_check
          %p162 = pneg %p43
        $region30: #{tpu_custom_call.1} parent=27 // pred_check_branch
          %164 = sbr.rel (%p162) target = $region32
        $region31: #{tpu_custom_call.1} parent=27 // pred_region
          %165 = dma.done %s158, 128
        $region32: #{tpu_custom_call.1} parent=27 // pred_fallthru
          _
        %s166 = sand.u32 %s56, 1
        %s167 = scalar_lea.sflag [#allocation6], %s166
        %s168 = sand.u32 %s56, 1
        %s169 = smul.addr %s168, 8
        %s170 = scalar_lea.vmem [#allocation5], %s169
        // Predicated region
        $region33: #{tpu_custom_call.1} parent=27 // pred_check
          %p171 = pneg %p69
        $region34: #{tpu_custom_call.1} parent=27 // pred_check_branch
          %173 = sbr.rel (%p171) target = $region36
        $region35: #{tpu_custom_call.1} parent=27 // pred_region
          %174 = dma.done %s167, 128
        $region36: #{tpu_custom_call.1} parent=27 // pred_fallthru
          _
        %s175 = sand.u32 %s30, 1
        %s176 = scalar_lea.sflag [#allocation3], %s175
        %s177 = sand.u32 %s30, 1
        %s178 = smul.addr %s177, 8
        %s179 = scalar_lea.vmem [#allocation2], %s178
        %p180 = pneg %p43
        %p181 = pneg %p40
        %s182 = sand.u32 %s56, 1
        %s183 = scalar_lea.sflag [#allocation6], %s182
        %s184 = sand.u32 %s56, 1
        %s185 = smul.addr %s184, 8
        %s186 = scalar_lea.vmem [#allocation5], %s185
        %p187 = pneg %p69
        %p188 = pneg %p66
        %p189 = pneg %p95
        %p190 = pneg %p92
        %s191 = sand.u32 %s82, 1
        %s192 = scalar_lea.sflag [#allocation4], %s191
        %s193 = sand.u32 %s82, 1
        %s194 = smul.addr %s193, 8
        %s195 = scalar_lea.vmem [#allocation7], %s194
        %v196 = vld [vmem:[%s161] sm:$0xff]
        %v197 = vld [vmem:[%s170] sm:$0xff]
        %v198 = vmax.f32 %v196, 0.0
        %v199 = vmul.f32 %v196, %v197
        %v200 = vsub.f32 %v198, %v199
        %v201 = vand.u32 2147483647, %v196
        %v202 = vsub.f32 0.0, %v201
        %v203 = vmul.f32 %v202, 1.442695
        %v204 = vpow.pop %v203
        %v205 = vadd.f32 %v204, 1.0
        %v206 = vlog2.pop %v205
        %v207 = vmul.f32 %v206, 0.6931472
        %v208 = vmul.f32 -0.5, %v204
        %v209 = vadd.f32 %v208, 1.0
        %v210 = vmul.f32 %v209, %v204
        %v211 = vand.u32 2147483647, %v204
        %vm212 = vcmp.lt.f32.partialorder %v211, 0.0004427343
        %v213 = vsel %vm212, %v210, %v207
        %v214 = vadd.f32 %v200, %v213
        %v215 = vsub.f32 0.0, %v214
        %v216 = vmul.f32 %v215, 1.442695
        %v217 = vpow.pop %v216
        %v218 = vsub.f32 1.0, %v217
        %v219 = vmul.f32 %v218, %v218
        %v220 = vmul.f32 %v219, %v214
        %v221 = vadd.f32 %v220, 0.0
        %222 = vst [vmem:[%s195] sm:$0xff] %v221
        %s223 = sand.u32 %s82, 1
        %s224 = scalar_lea.sflag [#allocation4], %s223
        %s225 = sand.u32 %s82, 1
        %s226 = smul.addr %s225, 8
        %s227 = scalar_lea.vmem [#allocation7], %s226
        // Predicated region
        $region37: #{tpu_custom_call.1} parent=27 // pred_check
          %p228 = pneg %p92
        $region38: #{tpu_custom_call.1} parent=27 // pred_check_branch
          %230 = sbr.rel (%p228) target = $region40
        $region39: #{tpu_custom_call.1} parent=27 // pred_region
          %s232 = ssub.s32 128, 128
          %233 = vsyncadd %s224, %s232
          %s234 = smul.addr %s22, 128
          %s235 = scalar_lea.hbm %s2, %s234
          %s237 = sshll.u32 %s227, 4
          %s238 = int_to_ptr.vmem [resolvable:$true] %s237
          %240 = dma.vmem_to_hbm [thread:$0]  %s238, 128, %s235, %s224
        $region40: #{tpu_custom_call.1} parent=27 // pred_fallthru
          _
      $region28: #{tpu_custom_call.1} parent=5 // pred_fallthru
        _
      %p241 = scmp.le.s32.totalorder 2, %s17
      // Predicated region
      $region41: #{tpu_custom_call.1} parent=5 // pred_check
        %p242 = pneg %p241
      $region42: #{tpu_custom_call.1} parent=5 // pred_check_branch
        %244 = sbr.rel (%p242) target = $region44
      $region43: #{tpu_custom_call.1} parent=5 // pred_region
        %s245 = ssub.s32 %s17, 2
        // Predicated region
        $region45: #{tpu_custom_call.1} parent=43 // pred_check
          %p246 = pneg %p98
        $region46: #{tpu_custom_call.1} parent=43 // pred_check_branch
          %248 = sbr.rel (%p246) target = $region48
        $region47: #{tpu_custom_call.1} parent=43 // pred_region
          %s249 = sand.u32 %s83, 1
          %s250 = scalar_lea.sflag [#allocation4], %s249
          %s251 = sand.u32 %s83, 1
          %s252 = smul.addr %s251, 8
          %s253 = scalar_lea.vmem [#allocation7], %s252
          %254 = dma.done %s250, 128
        $region48: #{tpu_custom_call.1} parent=43 // pred_fallthru
          _
      $region44: #{tpu_custom_call.1} parent=5 // pred_fallthru
        _
    $region6: #{tpu_custom_call.1} parent=1 // loop_footer
      %s21 = sadd.s32 1, %s17
    $region7: #{tpu_custom_call.1} parent=1 // loop_footer_branch
      %16 = sbr.rel target = $region3
    $region8: #{tpu_custom_call.1} parent=1 // loop_exit
      _
    %255 = vsyncpa [#allocation3], 1
    %s256 = scalar_lea.sflag [#allocation3], 1
    %257 = vsyncpa %s256, 1
    %258 = vsyncpa [#allocation6], 1
    %s259 = scalar_lea.sflag [#allocation6], 1
    %260 = vsyncpa %s259, 1
    %261 = vsyncpa [#allocation4], 1
    %s262 = scalar_lea.sflag [#allocation4], 1
    %263 = vsyncpa %s262, 1

</llo_original>
